<compile_context>
chip_gen: v5e
topology: v5e:2x2
jax: 0.10.0
libtpu: 0.0.40
codegen_flags: <defaults>
</compile_context>

<pallas_src>
import functools

import numpy as np

import jax
import jax.numpy as jnp
from jax import lax
from jax.experimental import pallas as pl
from jax.experimental.pallas import tpu as pltpu

LEAKY_SLOPE = 0.01   # F.leaky_relu default negative_slope
SUBLANE = 8          # f32 sublane tile


def _lrelu(v):
    return jnp.where(v > 0, v, LEAKY_SLOPE * v)


def _round_up(v, m):
    return (v + m - 1) // m * m


def _default_batch_blocks(n):
    """Grid-step heuristic: 1 step on single-TC chips (v5e/v6e), 2 steps on v7x (2 TCs)."""
    kind = ""
    try:
        kind = jax.devices()[0].device_kind.lower()
    except Exception:
        pass
    if "v7" in kind and n % 2 == 0:
        return 2
    return 1


def _build_tap_tables(H, W, ksize, pad, bt, conv_rows, pool_rows):
    """Static per-tap lane offsets and pre-broadcast edge masks.

    Masks are tiled across the `bt` lane-concatenated images and broadcast to full
    sublane height on the host so the in-kernel apply is a plain vmul / vadd.
    Rolls on the concatenated lane axis are safe: any tap that would leak across an
    image boundary lands exactly on a masked (out-of-image) position.
    """
    S = H * W
    hh, ww = np.divmod(np.arange(S), W)
    offsets, conv_m, pool_m = [], [], []
    for kh in range(ksize):
        for kw in range(ksize):
            dh, dw = kh - pad, kw - pad
            valid = ((hh + dh >= 0) & (hh + dh < H) &
                     (ww + dw >= 0) & (ww + dw < W))
            offsets.append(dh * W + dw)
            conv_m.append(valid.astype(np.float32))                          # 0 / 1
            pool_m.append(np.where(valid, 0.0, -np.inf).astype(np.float32))  # 0 / -inf
    T = len(offsets)
    conv_m = np.tile(np.stack(conv_m), (1, bt))                              # (T, bt*S)
    pool_m = np.tile(np.stack(pool_m), (1, bt))
    conv_m = np.ascontiguousarray(
        np.broadcast_to(conv_m[:, None, :], (T, conv_rows, bt * S)))
    pool_m = np.ascontiguousarray(
        np.broadcast_to(pool_m[:, None, :], (T, pool_rows, bt * S)))
    return offsets, jnp.asarray(conv_m), jnp.asarray(pool_m)


def _pack_conv_weight(w_hwio, c_pad, f_pad):
    """HWIO -> (f_pad, KH*KW*c_pad) im2col weight; channels zero-padded to sublane tiles.
    (PyTorch Conv2d weights are OIHW; converting to HWIO is the caller's job.)"""
    KH, KW, C, F = w_hwio.shape
    wp = jnp.zeros((KH, KW, c_pad, f_pad), w_hwio.dtype)
    wp = wp.at[:, :, :C, :F].set(w_hwio)
    return wp.reshape(KH * KW * c_pad, f_pad).T                              # k = tap*c_pad + c


def _pack_bias(b, f_pad):
    return jnp.zeros((f_pad, 1), b.dtype).at[:b.shape[0], 0].set(b)


def _make_kernel(tap_offsets, Cp, Fp, S_img, bt):
    L = bt * S_img            # lane extent: bt images concatenated along H*W

    def rolled(a, off):
        sh = (-off) % L
        return a if sh == 0 else pltpu.roll(a, shift=sh, axis=1)

    def kernel(x_ref, cm_ref, pm_ref, w0_ref, b0_ref, w1_ref, b1_ref, o_ref):
        # x_ref : (bt, C, S)          un-padded channels on sublanes, H*W on lanes
        # cm_ref: (T, max(Cp,Fp), L)  0/1 conv edge masks ('same' zero padding)
        # pm_ref: (T, Fp, L)          0/-inf pool masks (max-pool pads with -inf)
        # w*_ref: (Fp, T*Cin_p)       packed im2col weights;  b*_ref: (Fp, 1)
        # o_ref : (bt, Fp, S)
        C = x_ref.shape[1]

        # Lane-concatenate the bt images of this block -> (C, L).
        imgs = [x_ref[b].astype(jnp.float32) for b in range(bt)]
        x = imgs[0] if bt == 1 else jnp.concatenate(imgs, axis=1)
        # Pad channels to the 8-sublane tile in VMEM (padded rows hit zero weight rows);
        # no padded copy of the input is ever written to HBM.
        if Cp != C:
            x = jnp.concatenate([x, jnp.zeros((Cp - C, L), jnp.float32)], axis=0)

        def conv(a, cin, w_ref, b_ref):
            # On-the-fly im2col: each tap = lane rotation * 0/1 edge mask; taps stacked
            # on the (8-aligned) sublane axis -> one MXU matmul per conv. Note: with
            # Fp=8 the matmul M-dim uses <=3-6% of the MXU; the batch/spatial folding
            # on the RHS lane axis is the only widening lever at this config.
            cols = [rolled(a, off) * cm_ref[t, :cin]
                    for t, off in enumerate(tap_offsets)]
            patches = jnp.concatenate(cols, axis=0)                  # (T*cin, L)
            # TODO(synk): for large H*W (v7x has only 64 MiB VMEM) switch to per-tap
            # accumulating matmuls so this (T*cin, L) buffer never materialises.
            return jnp.dot(w_ref[...], patches,
                           preferred_element_type=jnp.float32) + b_ref[...]

        # conv_0 -> leaky_relu
        h0 = _lrelu(conv(x, Cp, w0_ref, b0_ref))                     # (Fp, L)

        # MaxPool2d(k, stride=1, padding): running max over the same rolled taps.
        pooled = None
        for t, off in enumerate(tap_offsets):
            cand = rolled(h0, off) + pm_ref[t]
            pooled = cand if pooled is None else jnp.maximum(pooled, cand)

        # Dropout(0.2): identity at inference time.
        # TODO(synk): training-mode dropout would need pltpu.prng_seed/prng_random_bits.

        # conv_1 -> leaky_relu
        h1 = _lrelu(conv(pooled, Fp, w1_ref, b1_ref))                # (Fp, L)

        # Full 8-aligned sublane store (unmasked); wrapper slices the real F channels.
        for b in range(bt):
            o_ref[b] = h1[:, b * S_img:(b + 1) * S_img].astype(o_ref.dtype)

    return kernel


def conv_dim_reduction_block_forward(x_nchw, w0, b0, w1, b1, *,
                                     kernel_size=3, padding=1, dilation=1,
                                     batch_blocks=None):
    """NCHW in / NCHW out forward of the module (inference-mode dropout)."""
    N, C, H, W = x_nchw.shape
    KH, KW, C_in, F = w0.shape
    assert (KH, KW, C_in) == (kernel_size, kernel_size, C)
    assert w1.shape == (kernel_size, kernel_size, F, F)
    assert dilation == 1, "TODO(synk): only dilation=1 is implemented"
    assert 2 * padding == kernel_size - 1, "kernel assumes 'same'-size conv/pool"

    S = H * W
    Cp = _round_up(C, SUBLANE)
    Fp = _round_up(F, SUBLANE)
    Cmax = max(Cp, Fp)

    nb = _default_batch_blocks(N) if batch_blocks is None else batch_blocks
    assert N % nb == 0
    bt = N // nb

    x = x_nchw.reshape(N, C, S)                                      # free reshape

    tap_offsets, conv_mask, pool_mask = _build_tap_tables(
        H, W, kernel_size, padding, bt, Cmax, Fp)
    # Weights kept f32 (1e-4 numerics). TODO(synk): at production C/F sizes cast the
    # packed weights + patches to bf16 (keep preferred_element_type=f32) for fewer MXU passes.
    w0c = _pack_conv_weight(w0, Cp, Fp)
    w1c = _pack_conv_weight(w1, Fp, Fp)
    b0c = _pack_bias(b0, Fp)
    b1c = _pack_bias(b1, Fp)

    out = pl.pallas_call(
        _make_kernel(tap_offsets, Cp, Fp, S, bt),
        out_shape=jax.ShapeDtypeStruct((N, Fp, S), x_nchw.dtype),
        grid=(nb,),
        in_specs=[
            pl.BlockSpec((bt, C, S), lambda n: (n, 0, 0)),           # bt images per step
            pl.BlockSpec(conv_mask.shape, lambda n: (0, 0, 0)),      # conv edge masks
            pl.BlockSpec(pool_mask.shape, lambda n: (0, 0, 0)),      # pool -inf masks
            pl.BlockSpec(w0c.shape, lambda n: (0, 0)),
            pl.BlockSpec(b0c.shape, lambda n: (0, 0)),
            pl.BlockSpec(w1c.shape, lambda n: (0, 0)),
            pl.BlockSpec(b1c.shape, lambda n: (0, 0)),
        ],
        out_specs=pl.BlockSpec((bt, Fp, S), lambda n: (n, 0, 0)),
        compiler_params=pltpu.CompilerParams(
            dimension_semantics=("parallel",)),
    )(x, conv_mask, pool_mask, w0c, b0c, w1c, b1c)

    return out[:, :F].reshape(N, F, H, W)                            # pad slice + free reshape


def _reference(x_nchw, w0, b0, w1, b1, *, kernel_size=3, padding=1):
    """Pure-JAX reference of the same forward pass (for verification)."""
    x = jnp.transpose(x_nchw, (0, 2, 3, 1))                          # NHWC
    dn = ('NHWC', 'HWIO', 'NHWC')
    prec = lax.Precision.HIGHEST
    h = lax.conv_general_dilated(x, w0, (1, 1), [(padding, padding)] * 2,
                                 dimension_numbers=dn, precision=prec) + b0
    h = _lrelu(h)
    h = lax.reduce_window(h, -jnp.inf, lax.max,
                          (1, kernel_size, kernel_size, 1), (1, 1, 1, 1),
                          [(0, 0), (padding, padding), (padding, padding), (0, 0)])
    # Dropout: identity at inference time.
    h = lax.conv_general_dilated(h, w1, (1, 1), [(padding, padding)] * 2,
                                 dimension_numbers=dn, precision=prec) + b1
    h = _lrelu(h)
    return jnp.transpose(h, (0, 3, 1, 2))


if __name__ == "__main__":
    # Module config: input_shape=(2,4,16,16), num_filters=4, kernel_size=3,
    # padding=1, dilation=1, bias=True. Note: despite the class name, the module code
    # has no BatchNorm and its pooling is stride-1 (spatial dims preserved);
    # reduction_factor is unused by the code.
    N, C, H, W = 2, 4, 16, 16
    F_out, K, PAD, DIL = 4, 3, 1, 1

    key = jax.random.PRNGKey(0)
    kx, kw0, kb0, kw1, kb1 = jax.random.split(key, 5)

    x = jax.random.normal(kx, (N, C, H, W), dtype=jnp.float32)
    scale0 = 1.0 / (C * K * K) ** 0.5
    scale1 = 1.0 / (F_out * K * K) ** 0.5
    w0 = jax.random.uniform(kw0, (K, K, C, F_out), jnp.float32, -scale0, scale0)   # HWIO
    b0 = jax.random.uniform(kb0, (F_out,), jnp.float32, -scale0, scale0)
    w1 = jax.random.uniform(kw1, (K, K, F_out, F_out), jnp.float32, -scale1, scale1)
    b1 = jax.random.uniform(kb1, (K * 0 + F_out,), jnp.float32, -scale1, scale1)

    fwd = jax.jit(functools.partial(conv_dim_reduction_block_forward,
                                    kernel_size=K, padding=PAD, dilation=DIL))
    out = jax.block_until_ready(fwd(x, w0, b0, w1, b1))

    ref = _reference(x, w0, b0, w1, b1, kernel_size=K, padding=PAD)
    assert out.shape == (N, F_out, H, W)
    assert jnp.allclose(out, ref, atol=2e-4, rtol=2e-4), "mismatch vs JAX reference"

    print("KERNEL_OK")
</pallas_src>

<mosaic_0001>
module attributes {stable_mosaic.version = 11 : i64} {
  func.func @kernel(%arg0: i32, %arg1: memref<2x4x256xf32, #tpu.memory_space<vmem>>, %arg2: memref<9x8x512xf32, #tpu.memory_space<vmem>>, %arg3: memref<9x8x512xf32, #tpu.memory_space<vmem>>, %arg4: memref<8x72xf32, #tpu.memory_space<vmem>>, %arg5: memref<8x1xf32, #tpu.memory_space<vmem>>, %arg6: memref<8x72xf32, #tpu.memory_space<vmem>>, %arg7: memref<8x1xf32, #tpu.memory_space<vmem>>, %arg8: memref<2x8x256xf32, #tpu.memory_space<vmem>>) attributes {dimension_semantics = [#tpu.dimension_semantics<parallel>], iteration_bounds = array<i64: 1>, scalar_prefetch = 0 : i64, scratch_operands = 0 : i64, tpu.core_type = #tpu.core_type<tc>, window_params = [{transform_indices = @transform_0, window_bounds = array<i64: 2, 4, 256>}, {pipeline_mode = #tpu.pipeline_mode<synchronous>, transform_indices = @transform_1, window_bounds = array<i64: 9, 8, 512>}, {pipeline_mode = #tpu.pipeline_mode<synchronous>, transform_indices = @transform_2, window_bounds = array<i64: 9, 8, 512>}, {pipeline_mode = #tpu.pipeline_mode<synchronous>, transform_indices = @transform_3, window_bounds = array<i64: 8, 72>}, {pipeline_mode = #tpu.pipeline_mode<synchronous>, transform_indices = @transform_4, window_bounds = array<i64: 8, 1>}, {pipeline_mode = #tpu.pipeline_mode<synchronous>, transform_indices = @transform_5, window_bounds = array<i64: 8, 72>}, {pipeline_mode = #tpu.pipeline_mode<synchronous>, transform_indices = @transform_6, window_bounds = array<i64: 8, 1>}, {transform_indices = @transform_7, window_bounds = array<i64: 2, 8, 256>}]} {
    %c0 = arith.constant 0 : index
    %c0_0 = arith.constant 0 : index
    %c0_1 = arith.constant 0 : index
    %0 = vector.load %arg1[%c0, %c0_0, %c0_1] : memref<2x4x256xf32, #tpu.memory_space<vmem>>, vector<1x4x256xf32>
    %1 = vector.shape_cast %0 : vector<1x4x256xf32> to vector<4x256xf32>
    %c1 = arith.constant 1 : index
    %c0_2 = arith.constant 0 : index
    %c0_3 = arith.constant 0 : index
    %2 = vector.load %arg1[%c1, %c0_2, %c0_3] : memref<2x4x256xf32, #tpu.memory_space<vmem>>, vector<1x4x256xf32>
    %3 = vector.shape_cast %2 : vector<1x4x256xf32> to vector<4x256xf32>
    %4 = tpu.concatenate %1, %3 in 1 : vector<4x256xf32>, vector<4x256xf32> -> vector<4x512xf32>
    %cst = arith.constant 0.000000e+00 : f32
    %5 = vector.broadcast %cst : f32 to vector<4x512xf32>
    %6 = tpu.concatenate %4, %5 in 0 : vector<4x512xf32>, vector<4x512xf32> -> vector<8x512xf32>
    %c17_i32 = arith.constant 17 : i32
    %7 = tpu.dynamic_rotate %6 by %c17_i32 dim 1 : vector<8x512xf32>, i32 -> vector<8x512xf32>
    %c0_4 = arith.constant 0 : index
    %c0_5 = arith.constant 0 : index
    %c0_6 = arith.constant 0 : index
    %8 = vector.load %arg2[%c0_4, %c0_5, %c0_6] : memref<9x8x512xf32, #tpu.memory_space<vmem>>, vector<1x8x512xf32>
    %9 = vector.shape_cast %8 : vector<1x8x512xf32> to vector<8x512xf32>
    %10 = arith.mulf %7, %9 : vector<8x512xf32>
    %c16_i32 = arith.constant 16 : i32
    %11 = tpu.dynamic_rotate %6 by %c16_i32 dim 1 : vector<8x512xf32>, i32 -> vector<8x512xf32>
    %c1_7 = arith.constant 1 : index
    %c0_8 = arith.constant 0 : index
    %c0_9 = arith.constant 0 : index
    %12 = vector.load %arg2[%c1_7, %c0_8, %c0_9] : memref<9x8x512xf32, #tpu.memory_space<vmem>>, vector<1x8x512xf32>
    %13 = vector.shape_cast %12 : vector<1x8x512xf32> to vector<8x512xf32>
    %14 = arith.mulf %11, %13 : vector<8x512xf32>
    %c15_i32 = arith.constant 15 : i32
    %15 = tpu.dynamic_rotate %6 by %c15_i32 dim 1 : vector<8x512xf32>, i32 -> vector<8x512xf32>
    %c2 = arith.constant 2 : index
    %c0_10 = arith.constant 0 : index
    %c0_11 = arith.constant 0 : index
    %16 = vector.load %arg2[%c2, %c0_10, %c0_11] : memref<9x8x512xf32, #tpu.memory_space<vmem>>, vector<1x8x512xf32>
    %17 = vector.shape_cast %16 : vector<1x8x512xf32> to vector<8x512xf32>
    %18 = arith.mulf %15, %17 : vector<8x512xf32>
    %c1_i32 = arith.constant 1 : i32
    %19 = tpu.dynamic_rotate %6 by %c1_i32 dim 1 : vector<8x512xf32>, i32 -> vector<8x512xf32>
    %c3 = arith.constant 3 : index
    %c0_12 = arith.constant 0 : index
    %c0_13 = arith.constant 0 : index
    %20 = vector.load %arg2[%c3, %c0_12, %c0_13] : memref<9x8x512xf32, #tpu.memory_space<vmem>>, vector<1x8x512xf32>
    %21 = vector.shape_cast %20 : vector<1x8x512xf32> to vector<8x512xf32>
    %22 = arith.mulf %19, %21 : vector<8x512xf32>
    %c4 = arith.constant 4 : index
    %c0_14 = arith.constant 0 : index
    %c0_15 = arith.constant 0 : index
    %23 = vector.load %arg2[%c4, %c0_14, %c0_15] : memref<9x8x512xf32, #tpu.memory_space<vmem>>, vector<1x8x512xf32>
    %24 = vector.shape_cast %23 : vector<1x8x512xf32> to vector<8x512xf32>
    %25 = arith.mulf %6, %24 : vector<8x512xf32>
    %c511_i32 = arith.constant 511 : i32
    %26 = tpu.dynamic_rotate %6 by %c511_i32 dim 1 : vector<8x512xf32>, i32 -> vector<8x512xf32>
    %c5 = arith.constant 5 : index
    %c0_16 = arith.constant 0 : index
    %c0_17 = arith.constant 0 : index
    %27 = vector.load %arg2[%c5, %c0_16, %c0_17] : memref<9x8x512xf32, #tpu.memory_space<vmem>>, vector<1x8x512xf32>
    %28 = vector.shape_cast %27 : vector<1x8x512xf32> to vector<8x512xf32>
    %29 = arith.mulf %26, %28 : vector<8x512xf32>
    %c497_i32 = arith.constant 497 : i32
    %30 = tpu.dynamic_rotate %6 by %c497_i32 dim 1 : vector<8x512xf32>, i32 -> vector<8x512xf32>
    %c6 = arith.constant 6 : index
    %c0_18 = arith.constant 0 : index
    %c0_19 = arith.constant 0 : index
    %31 = vector.load %arg2[%c6, %c0_18, %c0_19] : memref<9x8x512xf32, #tpu.memory_space<vmem>>, vector<1x8x512xf32>
    %32 = vector.shape_cast %31 : vector<1x8x512xf32> to vector<8x512xf32>
    %33 = arith.mulf %30, %32 : vector<8x512xf32>
    %c496_i32 = arith.constant 496 : i32
    %34 = tpu.dynamic_rotate %6 by %c496_i32 dim 1 : vector<8x512xf32>, i32 -> vector<8x512xf32>
    %c7 = arith.constant 7 : index
    %c0_20 = arith.constant 0 : index
    %c0_21 = arith.constant 0 : index
    %35 = vector.load %arg2[%c7, %c0_20, %c0_21] : memref<9x8x512xf32, #tpu.memory_space<vmem>>, vector<1x8x512xf32>
    %36 = vector.shape_cast %35 : vector<1x8x512xf32> to vector<8x512xf32>
    %37 = arith.mulf %34, %36 : vector<8x512xf32>
    %c495_i32 = arith.constant 495 : i32
    %38 = tpu.dynamic_rotate %6 by %c495_i32 dim 1 : vector<8x512xf32>, i32 -> vector<8x512xf32>
    %c8 = arith.constant 8 : index
    %c0_22 = arith.constant 0 : index
    %c0_23 = arith.constant 0 : index
    %39 = vector.load %arg2[%c8, %c0_22, %c0_23] : memref<9x8x512xf32, #tpu.memory_space<vmem>>, vector<1x8x512xf32>
    %40 = vector.shape_cast %39 : vector<1x8x512xf32> to vector<8x512xf32>
    %41 = arith.mulf %38, %40 : vector<8x512xf32>
    %42 = tpu.concatenate %10, %14, %18, %22, %25, %29, %33, %37, %41 in 0 : vector<8x512xf32>, vector<8x512xf32>, vector<8x512xf32>, vector<8x512xf32>, vector<8x512xf32>, vector<8x512xf32>, vector<8x512xf32>, vector<8x512xf32>, vector<8x512xf32> -> vector<72x512xf32>
    %c0_24 = arith.constant 0 : index
    %c0_25 = arith.constant 0 : index
    %43 = vector.load %arg4[%c0_24, %c0_25] : memref<8x72xf32, #tpu.memory_space<vmem>>, vector<8x72xf32>
    %cst_26 = arith.constant dense<0.000000e+00> : vector<8x512xf32>
    %44 = tpu.matmul %43, %42, %cst_26 {dimension_numbers = #tpu.dot_dimension_numbers<[1], [0], [0], [1], [0, 0, 1, 1], [], []>} : vector<8x72xf32>, vector<72x512xf32>, vector<8x512xf32> -> vector<8x512xf32>
    %c0_27 = arith.constant 0 : index
    %c0_28 = arith.constant 0 : index
    %45 = vector.load %arg5[%c0_27, %c0_28] : memref<8x1xf32, #tpu.memory_space<vmem>>, vector<8x1xf32>
    %46 = vector.broadcast %45 : vector<8x1xf32> to vector<8x512xf32>
    %47 = arith.addf %44, %46 : vector<8x512xf32>
    %cst_29 = arith.constant 0.000000e+00 : f32
    %48 = vector.broadcast %cst_29 : f32 to vector<8x512xf32>
    %49 = arith.cmpf ogt, %47, %48 : vector<8x512xf32>
    %cst_30 = arith.constant 0.00999999977 : f32
    %50 = vector.broadcast %cst_30 : f32 to vector<8x512xf32>
    %51 = arith.mulf %50, %47 : vector<8x512xf32>
    %52 = arith.select %49, %47, %51 : vector<8x512xi1>, vector<8x512xf32>
    %c17_i32_31 = arith.constant 17 : i32
    %53 = tpu.dynamic_rotate %52 by %c17_i32_31 dim 1 : vector<8x512xf32>, i32 -> vector<8x512xf32>
    %c0_32 = arith.constant 0 : index
    %c0_33 = arith.constant 0 : index
    %c0_34 = arith.constant 0 : index
    %54 = vector.load %arg3[%c0_32, %c0_33, %c0_34] : memref<9x8x512xf32, #tpu.memory_space<vmem>>, vector<1x8x512xf32>
    %55 = vector.shape_cast %54 : vector<1x8x512xf32> to vector<8x512xf32>
    %56 = arith.addf %53, %55 : vector<8x512xf32>
    %c16_i32_35 = arith.constant 16 : i32
    %57 = tpu.dynamic_rotate %52 by %c16_i32_35 dim 1 : vector<8x512xf32>, i32 -> vector<8x512xf32>
    %c1_36 = arith.constant 1 : index
    %c0_37 = arith.constant 0 : index
    %c0_38 = arith.constant 0 : index
    %58 = vector.load %arg3[%c1_36, %c0_37, %c0_38] : memref<9x8x512xf32, #tpu.memory_space<vmem>>, vector<1x8x512xf32>
    %59 = vector.shape_cast %58 : vector<1x8x512xf32> to vector<8x512xf32>
    %60 = arith.addf %57, %59 : vector<8x512xf32>
    %61 = arith.maximumf %56, %60 : vector<8x512xf32>
    %c15_i32_39 = arith.constant 15 : i32
    %62 = tpu.dynamic_rotate %52 by %c15_i32_39 dim 1 : vector<8x512xf32>, i32 -> vector<8x512xf32>
    %c2_40 = arith.constant 2 : index
    %c0_41 = arith.constant 0 : index
    %c0_42 = arith.constant 0 : index
    %63 = vector.load %arg3[%c2_40, %c0_41, %c0_42] : memref<9x8x512xf32, #tpu.memory_space<vmem>>, vector<1x8x512xf32>
    %64 = vector.shape_cast %63 : vector<1x8x512xf32> to vector<8x512xf32>
    %65 = arith.addf %62, %64 : vector<8x512xf32>
    %66 = arith.maximumf %61, %65 : vector<8x512xf32>
    %c1_i32_43 = arith.constant 1 : i32
    %67 = tpu.dynamic_rotate %52 by %c1_i32_43 dim 1 : vector<8x512xf32>, i32 -> vector<8x512xf32>
    %c3_44 = arith.constant 3 : index
    %c0_45 = arith.constant 0 : index
    %c0_46 = arith.constant 0 : index
    %68 = vector.load %arg3[%c3_44, %c0_45, %c0_46] : memref<9x8x512xf32, #tpu.memory_space<vmem>>, vector<1x8x512xf32>
    %69 = vector.shape_cast %68 : vector<1x8x512xf32> to vector<8x512xf32>
    %70 = arith.addf %67, %69 : vector<8x512xf32>
    %71 = arith.maximumf %66, %70 : vector<8x512xf32>
    %c4_47 = arith.constant 4 : index
    %c0_48 = arith.constant 0 : index
    %c0_49 = arith.constant 0 : index
    %72 = vector.load %arg3[%c4_47, %c0_48, %c0_49] : memref<9x8x512xf32, #tpu.memory_space<vmem>>, vector<1x8x512xf32>
    %73 = vector.shape_cast %72 : vector<1x8x512xf32> to vector<8x512xf32>
    %74 = arith.addf %52, %73 : vector<8x512xf32>
    %75 = arith.maximumf %71, %74 : vector<8x512xf32>
    %c511_i32_50 = arith.constant 511 : i32
    %76 = tpu.dynamic_rotate %52 by %c511_i32_50 dim 1 : vector<8x512xf32>, i32 -> vector<8x512xf32>
    %c5_51 = arith.constant 5 : index
    %c0_52 = arith.constant 0 : index
    %c0_53 = arith.constant 0 : index
    %77 = vector.load %arg3[%c5_51, %c0_52, %c0_53] : memref<9x8x512xf32, #tpu.memory_space<vmem>>, vector<1x8x512xf32>
    %78 = vector.shape_cast %77 : vector<1x8x512xf32> to vector<8x512xf32>
    %79 = arith.addf %76, %78 : vector<8x512xf32>
    %80 = arith.maximumf %75, %79 : vector<8x512xf32>
    %c497_i32_54 = arith.constant 497 : i32
    %81 = tpu.dynamic_rotate %52 by %c497_i32_54 dim 1 : vector<8x512xf32>, i32 -> vector<8x512xf32>
    %c6_55 = arith.constant 6 : index
    %c0_56 = arith.constant 0 : index
    %c0_57 = arith.constant 0 : index
    %82 = vector.load %arg3[%c6_55, %c0_56, %c0_57] : memref<9x8x512xf32, #tpu.memory_space<vmem>>, vector<1x8x512xf32>
    %83 = vector.shape_cast %82 : vector<1x8x512xf32> to vector<8x512xf32>
    %84 = arith.addf %81, %83 : vector<8x512xf32>
    %85 = arith.maximumf %80, %84 : vector<8x512xf32>
    %c496_i32_58 = arith.constant 496 : i32
    %86 = tpu.dynamic_rotate %52 by %c496_i32_58 dim 1 : vector<8x512xf32>, i32 -> vector<8x512xf32>
    %c7_59 = arith.constant 7 : index
    %c0_60 = arith.constant 0 : index
    %c0_61 = arith.constant 0 : index
    %87 = vector.load %arg3[%c7_59, %c0_60, %c0_61] : memref<9x8x512xf32, #tpu.memory_space<vmem>>, vector<1x8x512xf32>
    %88 = vector.shape_cast %87 : vector<1x8x512xf32> to vector<8x512xf32>
    %89 = arith.addf %86, %88 : vector<8x512xf32>
    %90 = arith.maximumf %85, %89 : vector<8x512xf32>
    %c495_i32_62 = arith.constant 495 : i32
    %91 = tpu.dynamic_rotate %52 by %c495_i32_62 dim 1 : vector<8x512xf32>, i32 -> vector<8x512xf32>
    %c8_63 = arith.constant 8 : index
    %c0_64 = arith.constant 0 : index
    %c0_65 = arith.constant 0 : index
    %92 = vector.load %arg3[%c8_63, %c0_64, %c0_65] : memref<9x8x512xf32, #tpu.memory_space<vmem>>, vector<1x8x512xf32>
    %93 = vector.shape_cast %92 : vector<1x8x512xf32> to vector<8x512xf32>
    %94 = arith.addf %91, %93 : vector<8x512xf32>
    %95 = arith.maximumf %90, %94 : vector<8x512xf32>
    %c17_i32_66 = arith.constant 17 : i32
    %96 = tpu.dynamic_rotate %95 by %c17_i32_66 dim 1 : vector<8x512xf32>, i32 -> vector<8x512xf32>
    %c0_67 = arith.constant 0 : index
    %c0_68 = arith.constant 0 : index
    %c0_69 = arith.constant 0 : index
    %97 = vector.load %arg2[%c0_67, %c0_68, %c0_69] : memref<9x8x512xf32, #tpu.memory_space<vmem>>, vector<1x8x512xf32>
    %98 = vector.shape_cast %97 : vector<1x8x512xf32> to vector<8x512xf32>
    %99 = arith.mulf %96, %98 : vector<8x512xf32>
    %c16_i32_70 = arith.constant 16 : i32
    %100 = tpu.dynamic_rotate %95 by %c16_i32_70 dim 1 : vector<8x512xf32>, i32 -> vector<8x512xf32>
    %c1_71 = arith.constant 1 : index
    %c0_72 = arith.constant 0 : index
    %c0_73 = arith.constant 0 : index
    %101 = vector.load %arg2[%c1_71, %c0_72, %c0_73] : memref<9x8x512xf32, #tpu.memory_space<vmem>>, vector<1x8x512xf32>
    %102 = vector.shape_cast %101 : vector<1x8x512xf32> to vector<8x512xf32>
    %103 = arith.mulf %100, %102 : vector<8x512xf32>
    %c15_i32_74 = arith.constant 15 : i32
    %104 = tpu.dynamic_rotate %95 by %c15_i32_74 dim 1 : vector<8x512xf32>, i32 -> vector<8x512xf32>
    %c2_75 = arith.constant 2 : index
    %c0_76 = arith.constant 0 : index
    %c0_77 = arith.constant 0 : index
    %105 = vector.load %arg2[%c2_75, %c0_76, %c0_77] : memref<9x8x512xf32, #tpu.memory_space<vmem>>, vector<1x8x512xf32>
    %106 = vector.shape_cast %105 : vector<1x8x512xf32> to vector<8x512xf32>
    %107 = arith.mulf %104, %106 : vector<8x512xf32>
    %c1_i32_78 = arith.constant 1 : i32
    %108 = tpu.dynamic_rotate %95 by %c1_i32_78 dim 1 : vector<8x512xf32>, i32 -> vector<8x512xf32>
    %c3_79 = arith.constant 3 : index
    %c0_80 = arith.constant 0 : index
    %c0_81 = arith.constant 0 : index
    %109 = vector.load %arg2[%c3_79, %c0_80, %c0_81] : memref<9x8x512xf32, #tpu.memory_space<vmem>>, vector<1x8x512xf32>
    %110 = vector.shape_cast %109 : vector<1x8x512xf32> to vector<8x512xf32>
    %111 = arith.mulf %108, %110 : vector<8x512xf32>
    %c4_82 = arith.constant 4 : index
    %c0_83 = arith.constant 0 : index
    %c0_84 = arith.constant 0 : index
    %112 = vector.load %arg2[%c4_82, %c0_83, %c0_84] : memref<9x8x512xf32, #tpu.memory_space<vmem>>, vector<1x8x512xf32>
    %113 = vector.shape_cast %112 : vector<1x8x512xf32> to vector<8x512xf32>
    %114 = arith.mulf %95, %113 : vector<8x512xf32>
    %c511_i32_85 = arith.constant 511 : i32
    %115 = tpu.dynamic_rotate %95 by %c511_i32_85 dim 1 : vector<8x512xf32>, i32 -> vector<8x512xf32>
    %c5_86 = arith.constant 5 : index
    %c0_87 = arith.constant 0 : index
    %c0_88 = arith.constant 0 : index
    %116 = vector.load %arg2[%c5_86, %c0_87, %c0_88] : memref<9x8x512xf32, #tpu.memory_space<vmem>>, vector<1x8x512xf32>
    %117 = vector.shape_cast %116 : vector<1x8x512xf32> to vector<8x512xf32>
    %118 = arith.mulf %115, %117 : vector<8x512xf32>
    %c497_i32_89 = arith.constant 497 : i32
    %119 = tpu.dynamic_rotate %95 by %c497_i32_89 dim 1 : vector<8x512xf32>, i32 -> vector<8x512xf32>
    %c6_90 = arith.constant 6 : index
    %c0_91 = arith.constant 0 : index
    %c0_92 = arith.constant 0 : index
    %120 = vector.load %arg2[%c6_90, %c0_91, %c0_92] : memref<9x8x512xf32, #tpu.memory_space<vmem>>, vector<1x8x512xf32>
    %121 = vector.shape_cast %120 : vector<1x8x512xf32> to vector<8x512xf32>
    %122 = arith.mulf %119, %121 : vector<8x512xf32>
    %c496_i32_93 = arith.constant 496 : i32
    %123 = tpu.dynamic_rotate %95 by %c496_i32_93 dim 1 : vector<8x512xf32>, i32 -> vector<8x512xf32>
    %c7_94 = arith.constant 7 : index
    %c0_95 = arith.constant 0 : index
    %c0_96 = arith.constant 0 : index
    %124 = vector.load %arg2[%c7_94, %c0_95, %c0_96] : memref<9x8x512xf32, #tpu.memory_space<vmem>>, vector<1x8x512xf32>
    %125 = vector.shape_cast %124 : vector<1x8x512xf32> to vector<8x512xf32>
    %126 = arith.mulf %123, %125 : vector<8x512xf32>
    %c495_i32_97 = arith.constant 495 : i32
    %127 = tpu.dynamic_rotate %95 by %c495_i32_97 dim 1 : vector<8x512xf32>, i32 -> vector<8x512xf32>
    %c8_98 = arith.constant 8 : index
    %c0_99 = arith.constant 0 : index
    %c0_100 = arith.constant 0 : index
    %128 = vector.load %arg2[%c8_98, %c0_99, %c0_100] : memref<9x8x512xf32, #tpu.memory_space<vmem>>, vector<1x8x512xf32>
    %129 = vector.shape_cast %128 : vector<1x8x512xf32> to vector<8x512xf32>
    %130 = arith.mulf %127, %129 : vector<8x512xf32>
    %131 = tpu.concatenate %99, %103, %107, %111, %114, %118, %122, %126, %130 in 0 : vector<8x512xf32>, vector<8x512xf32>, vector<8x512xf32>, vector<8x512xf32>, vector<8x512xf32>, vector<8x512xf32>, vector<8x512xf32>, vector<8x512xf32>, vector<8x512xf32> -> vector<72x512xf32>
    %c0_101 = arith.constant 0 : index
    %c0_102 = arith.constant 0 : index
    %132 = vector.load %arg6[%c0_101, %c0_102] : memref<8x72xf32, #tpu.memory_space<vmem>>, vector<8x72xf32>
    %cst_103 = arith.constant dense<0.000000e+00> : vector<8x512xf32>
    %133 = tpu.matmul %132, %131, %cst_103 {dimension_numbers = #tpu.dot_dimension_numbers<[1], [0], [0], [1], [0, 0, 1, 1], [], []>} : vector<8x72xf32>, vector<72x512xf32>, vector<8x512xf32> -> vector<8x512xf32>
    %c0_104 = arith.constant 0 : index
    %c0_105 = arith.constant 0 : index
    %134 = vector.load %arg7[%c0_104, %c0_105] : memref<8x1xf32, #tpu.memory_space<vmem>>, vector<8x1xf32>
    %135 = vector.broadcast %134 : vector<8x1xf32> to vector<8x512xf32>
    %136 = arith.addf %133, %135 : vector<8x512xf32>
    %cst_106 = arith.constant 0.000000e+00 : f32
    %137 = vector.broadcast %cst_106 : f32 to vector<8x512xf32>
    %138 = arith.cmpf ogt, %136, %137 : vector<8x512xf32>
    %cst_107 = arith.constant 0.00999999977 : f32
    %139 = vector.broadcast %cst_107 : f32 to vector<8x512xf32>
    %140 = arith.mulf %139, %136 : vector<8x512xf32>
    %141 = arith.select %138, %136, %140 : vector<8x512xi1>, vector<8x512xf32>
    %142 = vector.extract_strided_slice %141 {offsets = [0, 0], sizes = [8, 256], strides = [1, 1]} : vector<8x512xf32> to vector<8x256xf32>
    %c0_108 = arith.constant 0 : index
    %c0_109 = arith.constant 0 : index
    %c0_110 = arith.constant 0 : index
    %143 = vector.load %arg8[%c0_108, %c0_109, %c0_110] : memref<2x8x256xf32, #tpu.memory_space<vmem>>, vector<1x8x256xf32>
    %144 = vector.shape_cast %143 : vector<1x8x256xf32> to vector<8x256xf32>
    %145 = vector.shape_cast %142 : vector<8x256xf32> to vector<1x8x256xf32>
    tpu.vector_store %arg8[%c0_108, %c0_109, %c0_110], %145 {strides = array<i32>} : memref<2x8x256xf32, #tpu.memory_space<vmem>>, vector<1x8x256xf32>,
    %146 = vector.extract_strided_slice %141 {offsets = [0, 256], sizes = [8, 256], strides = [1, 1]} : vector<8x512xf32> to vector<8x256xf32>
    %c1_111 = arith.constant 1 : index
    %c0_112 = arith.constant 0 : index
    %c0_113 = arith.constant 0 : index
    %147 = vector.load %arg8[%c1_111, %c0_112, %c0_113] : memref<2x8x256xf32, #tpu.memory_space<vmem>>, vector<1x8x256xf32>
    %148 = vector.shape_cast %147 : vector<1x8x256xf32> to vector<8x256xf32>
    %149 = vector.shape_cast %146 : vector<8x256xf32> to vector<1x8x256xf32>
    tpu.vector_store %arg8[%c1_111, %c0_112, %c0_113], %149 {strides = array<i32>} : memref<2x8x256xf32, #tpu.memory_space<vmem>>, vector<1x8x256xf32>,
    return
  }
  func.func @transform_0(%arg0: i32) -> (i32, i32, i32) {
    %c0_i32 = arith.constant 0 : i32
    %c0_i32_0 = arith.constant 0 : i32
    %c0_i32_1 = arith.constant 0 : i32
    return %arg0, %c0_i32, %c0_i32_0 : i32, i32, i32
  }
  func.func @transform_1(%arg0: i32) -> (i32, i32, i32) {
    %c0_i32 = arith.constant 0 : i32
    %c0_i32_0 = arith.constant 0 : i32
    %c0_i32_1 = arith.constant 0 : i32
    %c0_i32_2 = arith.constant 0 : i32
    return %c0_i32, %c0_i32_0, %c0_i32_1 : i32, i32, i32
  }
  func.func @transform_2(%arg0: i32) -> (i32, i32, i32) {
    %c0_i32 = arith.constant 0 : i32
    %c0_i32_0 = arith.constant 0 : i32
    %c0_i32_1 = arith.constant 0 : i32
    %c0_i32_2 = arith.constant 0 : i32
    return %c0_i32, %c0_i32_0, %c0_i32_1 : i32, i32, i32
  }
  func.func @transform_3(%arg0: i32) -> (i32, i32) {
    %c0_i32 = arith.constant 0 : i32
    %c0_i32_0 = arith.constant 0 : i32
    %c0_i32_1 = arith.constant 0 : i32
    return %c0_i32, %c0_i32_0 : i32, i32
  }
  func.func @transform_4(%arg0: i32) -> (i32, i32) {
    %c0_i32 = arith.constant 0 : i32
    %c0_i32_0 = arith.constant 0 : i32
    %c0_i32_1 = arith.constant 0 : i32
    return %c0_i32, %c0_i32_0 : i32, i32
  }
  func.func @transform_5(%arg0: i32) -> (i32, i32) {
    %c0_i32 = arith.constant 0 : i32
    %c0_i32_0 = arith.constant 0 : i32
    %c0_i32_1 = arith.constant 0 : i32
    return %c0_i32, %c0_i32_0 : i32, i32
  }
  func.func @transform_6(%arg0: i32) -> (i32, i32) {
    %c0_i32 = arith.constant 0 : i32
    %c0_i32_0 = arith.constant 0 : i32
    %c0_i32_1 = arith.constant 0 : i32
    return %c0_i32, %c0_i32_0 : i32, i32
  }
  func.func @transform_7(%arg0: i32) -> (i32, i32, i32) {
    %c0_i32 = arith.constant 0 : i32
    %c0_i32_0 = arith.constant 0 : i32
    %c0_i32_1 = arith.constant 0 : i32
    return %arg0, %c0_i32, %c0_i32_0 : i32, i32, i32
  }
}

</mosaic_0001>

<llo_original>
// kernel: conv_dim_reduction_block_forward.1
$region0: #{conv_dim_reduction_block_forward.1}
  #allocation0 [shape = 'u32[]', space=smem, size = 0x4, offset = 0x4, fixed_abs, tag = 'smem constant byte address 0x4 - core index']
  #allocation1 [shape = 'u32[72,128]{1,0:T(1,128)}', space=vmem, size = 0x9000, scoped, tag = 'internal scratch']
  %s0 = inlined_call_operand.vmem [shape: f32[2,4,256], index: 0, kind: input, shape index: {}]
  %s1 = inlined_call_operand.hbm [shape: f32[9,8,512], index: 1, kind: input, shape index: {}]
  %s2 = inlined_call_operand.hbm [shape: f32[9,8,512], index: 2, kind: input, shape index: {}]
  %s3 = inlined_call_operand.vmem [shape: f32[8,72], index: 3, kind: input, shape index: {}]
  %s4 = inlined_call_operand.vmem [shape: f32[8,1], index: 4, kind: input, shape index: {}]
  %s5 = inlined_call_operand.vmem [shape: f32[8,72], index: 5, kind: input, shape index: {}]
  %s6 = inlined_call_operand.vmem [shape: f32[8,1], index: 6, kind: input, shape index: {}]
  %s7 = inlined_call_operand.vmem [shape: f32[2,8,256], index: 7, kind: output, shape index: {}]
  %s8 = sld [smem:[#allocation0]]
  $region46: #{conv_dim_reduction_block_forward.1} parent=0
    _
  %s10 = ssub.s32 1, %s8
  %s11 = scalar_select 0, %s10, %s8
  $region1: #{conv_dim_reduction_block_forward.1} parent=0
    #allocation2 [shape = 'u8[147456]{0}', space=vmem, size = 0x24000, scoped, tag = 'input window, operand 1, single buffered']
    #allocation3 [shape = 's32[1]{0}', space=sflag, size = 0x4, scoped, tag = 'scoped memory for conv_dim_reduction_block_forward.1']
    #allocation4 [shape = 'u8[147456]{0}', space=vmem, size = 0x24000, scoped, tag = 'input window, operand 2, single buffered']
    #allocation5 [shape = 's32[1]{0}', space=sflag, size = 0x4, scoped, tag = 'scoped memory for conv_dim_reduction_block_forward.1']
    %12 = vsyncpa [#allocation3], 0
    %13 = vsyncpa [#allocation5], 0
    // Predicated region
    $region2: #{conv_dim_reduction_block_forward.1} parent=1 // pred_check
      _
    $region3: #{conv_dim_reduction_block_forward.1} parent=1 // pred_check_branch
      %15 = sbr.rel (0) target = $region5
    $region4: #{conv_dim_reduction_block_forward.1} parent=1 // pred_region
      _
    $region5: #{conv_dim_reduction_block_forward.1} parent=1 // pred_fallthru
      _
    // Predicated region
    $region6: #{conv_dim_reduction_block_forward.1} parent=1 // pred_check
      _
    $region7: #{conv_dim_reduction_block_forward.1} parent=1 // pred_check_branch
      %17 = sbr.rel (0) target = $region9
    $region8: #{conv_dim_reduction_block_forward.1} parent=1 // pred_region
      %19 = vsyncadd [#allocation3], 0
      %s20 = sshll.u32 %s1, 4
      %s21 = int_to_ptr.hbm [resolvable:$true] %s20
      %s22 = sshll.u32 [#allocation2], 4
      %s23 = int_to_ptr.vmem [resolvable:$true] %s22
      %28 = dma.hbm_to_vmem [thread:$0]  %s21, 4608, %s23, [#allocation3], 512, 512, 32
    $region9: #{conv_dim_reduction_block_forward.1} parent=1 // pred_fallthru
      _
    // Predicated region
    $region10: #{conv_dim_reduction_block_forward.1} parent=1 // pred_check
      _
    $region11: #{conv_dim_reduction_block_forward.1} parent=1 // pred_check_branch
      %30 = sbr.rel (0) target = $region13
    $region12: #{conv_dim_reduction_block_forward.1} parent=1 // pred_region
      %32 = vsyncadd [#allocation5], 0
      %s33 = sshll.u32 %s2, 4
      %s34 = int_to_ptr.hbm [resolvable:$true] %s33
      %s35 = sshll.u32 [#allocation4], 4
      %s36 = int_to_ptr.vmem [resolvable:$true] %s35
      %41 = dma.hbm_to_vmem [thread:$0]  %s34, 4608, %s36, [#allocation5], 512, 512, 32
    $region13: #{conv_dim_reduction_block_forward.1} parent=1 // pred_fallthru
      _
    // Predicated region
    $region14: #{conv_dim_reduction_block_forward.1} parent=1 // pred_check
      _
    $region15: #{conv_dim_reduction_block_forward.1} parent=1 // pred_check_branch
      %43 = sbr.rel (0) target = $region17
    $region16: #{conv_dim_reduction_block_forward.1} parent=1 // pred_region
      _
    $region17: #{conv_dim_reduction_block_forward.1} parent=1 // pred_fallthru
      _
    // Predicated region
    $region18: #{conv_dim_reduction_block_forward.1} parent=1 // pred_check
      _
    $region19: #{conv_dim_reduction_block_forward.1} parent=1 // pred_check_branch
      %45 = sbr.rel (0) target = $region21
    $region20: #{conv_dim_reduction_block_forward.1} parent=1 // pred_region
      _
    $region21: #{conv_dim_reduction_block_forward.1} parent=1 // pred_fallthru
      _
    // Predicated region
    $region22: #{conv_dim_reduction_block_forward.1} parent=1 // pred_check
      _
    $region23: #{conv_dim_reduction_block_forward.1} parent=1 // pred_check_branch
      %47 = sbr.rel (0) target = $region25
    $region24: #{conv_dim_reduction_block_forward.1} parent=1 // pred_region
      _
    $region25: #{conv_dim_reduction_block_forward.1} parent=1 // pred_fallthru
      _
    // Predicated region
    $region26: #{conv_dim_reduction_block_forward.1} parent=1 // pred_check
      _
    $region27: #{conv_dim_reduction_block_forward.1} parent=1 // pred_check_branch
      %49 = sbr.rel (0) target = $region29
    $region28: #{conv_dim_reduction_block_forward.1} parent=1 // pred_region
      _
    $region29: #{conv_dim_reduction_block_forward.1} parent=1 // pred_fallthru
      _
    // Predicated region
    $region30: #{conv_dim_reduction_block_forward.1} parent=1 // pred_check
      _
    $region31: #{conv_dim_reduction_block_forward.1} parent=1 // pred_check_branch
      %51 = sbr.rel (0) target = $region33
    $region32: #{conv_dim_reduction_block_forward.1} parent=1 // pred_region
      %53 = dma.done [#allocation3], 4608
    $region33: #{conv_dim_reduction_block_forward.1} parent=1 // pred_fallthru
      _
    // Predicated region
    $region34: #{conv_dim_reduction_block_forward.1} parent=1 // pred_check
      _
    $region35: #{conv_dim_reduction_block_forward.1} parent=1 // pred_check_branch
      %55 = sbr.rel (0) target = $region37
    $region36: #{conv_dim_reduction_block_forward.1} parent=1 // pred_region
      %57 = dma.done [#allocation5], 4608
    $region37: #{conv_dim_reduction_block_forward.1} parent=1 // pred_fallthru
      _
    %v58 = vld [vmem:[%s0] sm:$0xff]
    %s59 = scalar_lea.vmem %s0, 8
    %v60 = vld [vmem:[%s59] sm:$0xff]
    %62 = vst [vmem:[#allocation1] ss:$2 sm:$0xff] %v58
    %v63 = vld.sshfl [vmem:[#allocation1] sm:$0xff pattern:$0x75316420]
    %v64 = vld.sshfl [vmem:[#allocation1 + $0x8] sm:$0xff pattern:$0x75316420]
    %68 = vst [vmem:[#allocation1] ss:$2 sm:$0xff] %v60
    %v69 = vld.sshfl [vmem:[#allocation1] sm:$0xff pattern:$0x75316420]
    %v70 = vld.sshfl [vmem:[#allocation1 + $0x8] sm:$0xff pattern:$0x75316420]
    %vm73 = vcmask 1043456
    %v74 = vsel %vm73, %v63, 0.0
    %v75 = vsel %vm73, %v64, 0.0
    %v76 = vsel %vm73, %v69, 0.0
    %v77 = vsel %vm73, %v70, 0.0
    %78 = vrot.lane.b32.xlu0 %v74, 17
    %v79 = vpop.permute.xlu0 %78
    %80 = vrot.lane.b32.xlu0 %v75, 17
    %v81 = vpop.permute.xlu0 %80
    %82 = vrot.lane.b32.xlu0 %v76, 17
    %v83 = vpop.permute.xlu0 %82
    %84 = vrot.lane.b32.xlu0 %v77, 17
    %v85 = vpop.permute.xlu0 %84
    %v86 = vlaneseq
    %v87 = vand.u32 %v86, 127
    %vm88 = vcmp.lt.s32.totalorder %v87, 17
    %v89 = vsel %vm88, %v83, %v85
    %v90 = vsel %vm88, %v81, %v83
    %v91 = vsel %vm88, %v79, %v81
    %v92 = vsel %vm88, %v85, %v79
    %v93 = vld [vmem:[#allocation2] sm:$0xff]
    %v94 = vld [vmem:[#allocation2 + $0x8] sm:$0xff]
    %v95 = vld [vmem:[#allocation2 + $0x10] sm:$0xff]
    %v96 = vld [vmem:[#allocation2 + $0x18] sm:$0xff]
    %v97 = vmul.f32 %v92, %v93
    %v98 = vmul.f32 %v91, %v94
    %v99 = vmul.f32 %v90, %v95
    %v100 = vmul.f32 %v89, %v96
    %101 = vrot.lane.b32.xlu0 %v74, 16
    %v102 = vpop.permute.xlu0 %101
    %103 = vrot.lane.b32.xlu0 %v75, 16
    %v104 = vpop.permute.xlu0 %103
    %105 = vrot.lane.b32.xlu0 %v76, 16
    %v106 = vpop.permute.xlu0 %105
    %107 = vrot.lane.b32.xlu0 %v77, 16
    %v108 = vpop.permute.xlu0 %107
    %vm109 = vcmp.lt.s32.totalorder %v87, 16
    %v110 = vsel %vm109, %v106, %v108
    %v111 = vsel %vm109, %v104, %v106
    %v112 = vsel %vm109, %v102, %v104
    %v113 = vsel %vm109, %v108, %v102
    %s114 = scalar_lea.vmem [#allocation2], 32
    %v115 = vld [vmem:[%s114] sm:$0xff]
    %v116 = vld [vmem:[%s114 + $0x8] sm:$0xff]
    %v117 = vld [vmem:[%s114 + $0x10] sm:$0xff]
    %v118 = vld [vmem:[%s114 + $0x18] sm:$0xff]
    %v119 = vmul.f32 %v113, %v115
    %v120 = vmul.f32 %v112, %v116
    %v121 = vmul.f32 %v111, %v117
    %v122 = vmul.f32 %v110, %v118
    %123 = vrot.lane.b32.xlu0 %v74, 15
    %v124 = vpop.permute.xlu0 %123
    %125 = vrot.lane.b32.xlu0 %v75, 15
    %v126 = vpop.permute.xlu0 %125
    %127 = vrot.lane.b32.xlu0 %v76, 15
    %v128 = vpop.permute.xlu0 %127
    %129 = vrot.lane.b32.xlu0 %v77, 15
    %v130 = vpop.permute.xlu0 %129
    %vm131 = vcmp.lt.s32.totalorder %v87, 15
    %v132 = vsel %vm131, %v128, %v130
    %v133 = vsel %vm131, %v126, %v128
    %v134 = vsel %vm131, %v124, %v126
    %v135 = vsel %vm131, %v130, %v124
    %s136 = scalar_lea.vmem [#allocation2], 64
    %v137 = vld [vmem:[%s136] sm:$0xff]
    %v138 = vld [vmem:[%s136 + $0x8] sm:$0xff]
    %v139 = vld [vmem:[%s136 + $0x10] sm:$0xff]
    %v140 = vld [vmem:[%s136 + $0x18] sm:$0xff]
    %v141 = vmul.f32 %v135, %v137
    %v142 = vmul.f32 %v134, %v138
    %v143 = vmul.f32 %v133, %v139
    %v144 = vmul.f32 %v132, %v140
    %145 = vrot.lane.b32.xlu0 %v74, 1
    %v146 = vpop.permute.xlu0 %145
    %147 = vrot.lane.b32.xlu0 %v75, 1
    %v148 = vpop.permute.xlu0 %147
    %149 = vrot.lane.b32.xlu0 %v76, 1
    %v150 = vpop.permute.xlu0 %149
    %151 = vrot.lane.b32.xlu0 %v77, 1
    %v152 = vpop.permute.xlu0 %151
    %vm153 = vcmp.lt.s32.totalorder %v87, 1
    %v154 = vsel %vm153, %v150, %v152
    %v155 = vsel %vm153, %v148, %v150
    %v156 = vsel %vm153, %v146, %v148
    %v157 = vsel %vm153, %v152, %v146
    %s158 = scalar_lea.vmem [#allocation2], 96
    %v159 = vld [vmem:[%s158] sm:$0xff]
    %v160 = vld [vmem:[%s158 + $0x8] sm:$0xff]
    %v161 = vld [vmem:[%s158 + $0x10] sm:$0xff]
    %v162 = vld [vmem:[%s158 + $0x18] sm:$0xff]
    %v163 = vmul.f32 %v157, %v159
    %v164 = vmul.f32 %v156, %v160
    %v165 = vmul.f32 %v155, %v161
    %v166 = vmul.f32 %v154, %v162
    %s167 = scalar_lea.vmem [#allocation2], 128
    %v168 = vld [vmem:[%s167] sm:$0xff]
    %v169 = vld [vmem:[%s167 + $0x8] sm:$0xff]
    %v170 = vld [vmem:[%s167 + $0x10] sm:$0xff]
    %v171 = vld [vmem:[%s167 + $0x18] sm:$0xff]
    %v172 = vmul.f32 %v74, %v168
    %v173 = vmul.f32 %v75, %v169
    %v174 = vmul.f32 %v76, %v170
    %v175 = vmul.f32 %v77, %v171
    %176 = vrot.lane.b32.xlu0 %v74, 127
    %v177 = vpop.permute.xlu0 %176
    %178 = vrot.lane.b32.xlu0 %v75, 127
    %v179 = vpop.permute.xlu0 %178
    %180 = vrot.lane.b32.xlu0 %v76, 127
    %v181 = vpop.permute.xlu0 %180
    %182 = vrot.lane.b32.xlu0 %v77, 127
    %v183 = vpop.permute.xlu0 %182
    %vm184 = vcmp.lt.s32.totalorder %v87, 127
    %v185 = vsel %vm184, %v181, %v183
    %v186 = vsel %vm184, %v179, %v181
    %v187 = vsel %vm184, %v177, %v179
    %v188 = vsel %vm184, %v183, %v177
    %s189 = scalar_lea.vmem [#allocation2], 160
    %v190 = vld [vmem:[%s189] sm:$0xff]
    %v191 = vld [vmem:[%s189 + $0x8] sm:$0xff]
    %v192 = vld [vmem:[%s189 + $0x10] sm:$0xff]
    %v193 = vld [vmem:[%s189 + $0x18] sm:$0xff]
    %v194 = vmul.f32 %v187, %v190
    %v195 = vmul.f32 %v186, %v191
    %v196 = vmul.f32 %v185, %v192
    %v197 = vmul.f32 %v188, %v193
    %198 = vrot.lane.b32.xlu0 %v74, 113
    %v199 = vpop.permute.xlu0 %198
    %200 = vrot.lane.b32.xlu0 %v75, 113
    %v201 = vpop.permute.xlu0 %200
    %202 = vrot.lane.b32.xlu0 %v76, 113
    %v203 = vpop.permute.xlu0 %202
    %204 = vrot.lane.b32.xlu0 %v77, 113
    %v205 = vpop.permute.xlu0 %204
    %vm206 = vcmp.lt.s32.totalorder %v87, 113
    %v207 = vsel %vm206, %v203, %v205
    %v208 = vsel %vm206, %v201, %v203
    %v209 = vsel %vm206, %v199, %v201
    %v210 = vsel %vm206, %v205, %v199
    %s211 = scalar_lea.vmem [#allocation2], 192
    %v212 = vld [vmem:[%s211] sm:$0xff]
    %v213 = vld [vmem:[%s211 + $0x8] sm:$0xff]
    %v214 = vld [vmem:[%s211 + $0x10] sm:$0xff]
    %v215 = vld [vmem:[%s211 + $0x18] sm:$0xff]
    %v216 = vmul.f32 %v209, %v212
    %v217 = vmul.f32 %v208, %v213
    %v218 = vmul.f32 %v207, %v214
    %v219 = vmul.f32 %v210, %v215
    %220 = vrot.lane.b32.xlu0 %v74, 112
    %v221 = vpop.permute.xlu0 %220
    %222 = vrot.lane.b32.xlu0 %v75, 112
    %v223 = vpop.permute.xlu0 %222
    %224 = vrot.lane.b32.xlu0 %v76, 112
    %v225 = vpop.permute.xlu0 %224
    %226 = vrot.lane.b32.xlu0 %v77, 112
    %v227 = vpop.permute.xlu0 %226
    %vm228 = vcmp.lt.s32.totalorder %v87, 112
    %v229 = vsel %vm228, %v225, %v227
    %v230 = vsel %vm228, %v223, %v225
    %v231 = vsel %vm228, %v221, %v223
    %v232 = vsel %vm228, %v227, %v221
    %s233 = scalar_lea.vmem [#allocation2], 224
    %v234 = vld [vmem:[%s233] sm:$0xff]
    %v235 = vld [vmem:[%s233 + $0x8] sm:$0xff]
    %v236 = vld [vmem:[%s233 + $0x10] sm:$0xff]
    %v237 = vld [vmem:[%s233 + $0x18] sm:$0xff]
    %v238 = vmul.f32 %v231, %v234
    %v239 = vmul.f32 %v230, %v235
    %v240 = vmul.f32 %v229, %v236
    %v241 = vmul.f32 %v232, %v237
    %242 = vrot.lane.b32.xlu0 %v74, 111
    %v243 = vpop.permute.xlu0 %242
    %244 = vrot.lane.b32.xlu0 %v75, 111
    %v245 = vpop.permute.xlu0 %244
    %246 = vrot.lane.b32.xlu0 %v76, 111
    %v247 = vpop.permute.xlu0 %246
    %248 = vrot.lane.b32.xlu0 %v77, 111
    %v249 = vpop.permute.xlu0 %248
    %vm250 = vcmp.lt.s32.totalorder %v87, 111
    %v251 = vsel %vm250, %v247, %v249
    %v252 = vsel %vm250, %v245, %v247
    %v253 = vsel %vm250, %v243, %v245
    %v254 = vsel %vm250, %v249, %v243
    %s255 = scalar_lea.vmem [#allocation2], 256
    %v256 = vld [vmem:[%s255] sm:$0xff]
    %v257 = vld [vmem:[%s255 + $0x8] sm:$0xff]
    %v258 = vld [vmem:[%s255 + $0x10] sm:$0xff]
    %v259 = vld [vmem:[%s255 + $0x18] sm:$0xff]
    %v260 = vmul.f32 %v253, %v256
    %v261 = vmul.f32 %v252, %v257
    %v262 = vmul.f32 %v251, %v258
    %v263 = vmul.f32 %v254, %v259
    %v264 = vld [vmem:[%s3] sm:$0xff]
    %v265 = vld [vmem:[%s4] sm:$0xff]
    %267 = vset.pattern.permute.xlu0 0
    %268 = vperm.xlu0 %267, %v265
    %v269 = vpop.permute.xlu0 %268
    %vm271 = vcmask 588800
    %v273 = vsel %vm271, %v264, 0
    %275 = vmatpush.msra.mxu0 0.0
    %276 = vmatpush.msra.mxu0 0.0
    %277 = vmatpush.msra.mxu0 0.0
    %278 = vmatpush.msra.mxu0 0.0
    %279 = vmatpush.msra.mxu0 0.0
    %280 = vmatpush.msra.mxu0 0.0
    %281 = vmatpush.msra.mxu0 0.0
    %282 = vmatpush.msra.mxu0 %v260
    %283 = vmatpush.msra.mxu0 %v238
    %284 = vmatpush.msra.mxu0 %v216
    %285 = vmatpush.msra.mxu0 %v194
    %286 = vmatpush.msra.mxu0 %v172
    %287 = vmatpush.msra.mxu0 %v163
    %288 = vmatpush.msra.mxu0 %v141
    %289 = vmatpush.msra.mxu0 %v119
    %290 = vmatpush.msra.mxu0 %v97
    %291 = vmatmul.f32.gmra.mxu0 %v273
    %v292 = vpop.f32.mrf.mxu0
    %v293 = vadd.f32 %v269, %v292
    %294 = vdwg.mxu0
    %295 = vmatpush.msra.mxu0 0.0
    %296 = vmatpush.msra.mxu0 0.0
    %297 = vmatpush.msra.mxu0 0.0
    %298 = vmatpush.msra.mxu0 0.0
    %299 = vmatpush.msra.mxu0 0.0
    %300 = vmatpush.msra.mxu0 0.0
    %301 = vmatpush.msra.mxu0 0.0
    %302 = vmatpush.msra.mxu0 %v261
    %303 = vmatpush.msra.mxu0 %v239
    %304 = vmatpush.msra.mxu0 %v217
    %305 = vmatpush.msra.mxu0 %v195
    %306 = vmatpush.msra.mxu0 %v173
    %307 = vmatpush.msra.mxu0 %v164
    %308 = vmatpush.msra.mxu0 %v142
    %309 = vmatpush.msra.mxu0 %v120
    %310 = vmatpush.msra.mxu0 %v98
    %311 = vmatmul.f32.gmra.mxu0 %v273
    %v312 = vpop.f32.mrf.mxu0
    %v313 = vadd.f32 %v269, %v312
    %314 = vdwg.mxu0
    %315 = vmatpush.msra.mxu0 0.0
    %316 = vmatpush.msra.mxu0 0.0
    %317 = vmatpush.msra.mxu0 0.0
    %318 = vmatpush.msra.mxu0 0.0
    %319 = vmatpush.msra.mxu0 0.0
    %320 = vmatpush.msra.mxu0 0.0
    %321 = vmatpush.msra.mxu0 0.0
    %322 = vmatpush.msra.mxu0 %v262
    %323 = vmatpush.msra.mxu0 %v240
    %324 = vmatpush.msra.mxu0 %v218
    %325 = vmatpush.msra.mxu0 %v196
    %326 = vmatpush.msra.mxu0 %v174
    %327 = vmatpush.msra.mxu0 %v165
    %328 = vmatpush.msra.mxu0 %v143
    %329 = vmatpush.msra.mxu0 %v121
    %330 = vmatpush.msra.mxu0 %v99
    %331 = vmatmul.f32.gmra.mxu0 %v273
    %v332 = vpop.f32.mrf.mxu0
    %v333 = vadd.f32 %v269, %v332
    %334 = vdwg.mxu0
    %335 = vmatpush.msra.mxu0 0.0
    %336 = vmatpush.msra.mxu0 0.0
    %337 = vmatpush.msra.mxu0 0.0
    %338 = vmatpush.msra.mxu0 0.0
    %339 = vmatpush.msra.mxu0 0.0
    %340 = vmatpush.msra.mxu0 0.0
    %341 = vmatpush.msra.mxu0 0.0
    %342 = vmatpush.msra.mxu0 %v263
    %343 = vmatpush.msra.mxu0 %v241
    %344 = vmatpush.msra.mxu0 %v219
    %345 = vmatpush.msra.mxu0 %v197
    %346 = vmatpush.msra.mxu0 %v175
    %347 = vmatpush.msra.mxu0 %v166
    %348 = vmatpush.msra.mxu0 %v144
    %349 = vmatpush.msra.mxu0 %v122
    %350 = vmatpush.msra.mxu0 %v100
    %351 = vmatmul.f32.gmra.mxu0 %v273
    %v352 = vpop.f32.mrf.mxu0
    %v353 = vadd.f32 %v269, %v352
    %354 = vdwg.mxu0
    %vm355 = vcmp.gt.f32.partialorder %v293, 0.0
    %vm356 = vcmp.gt.f32.partialorder %v313, 0.0
    %vm357 = vcmp.gt.f32.partialorder %v333, 0.0
    %vm358 = vcmp.gt.f32.partialorder %v353, 0.0
    %v359 = vmul.f32 %v293, 0.01
    %v360 = vmul.f32 %v313, 0.01
    %v361 = vmul.f32 %v333, 0.01
    %v362 = vmul.f32 %v353, 0.01
    %v363 = vsel %vm355, %v293, %v359
    %v364 = vsel %vm356, %v313, %v360
    %v365 = vsel %vm357, %v333, %v361
    %v366 = vsel %vm358, %v353, %v362
    %367 = vrot.lane.b32.xlu0 %v363, 17
    %v368 = vpop.permute.xlu0 %367
    %369 = vrot.lane.b32.xlu0 %v364, 17
    %v370 = vpop.permute.xlu0 %369
    %371 = vrot.lane.b32.xlu0 %v365, 17
    %v372 = vpop.permute.xlu0 %371
    %373 = vrot.lane.b32.xlu0 %v366, 17
    %v374 = vpop.permute.xlu0 %373
    %v375 = vsel %vm88, %v372, %v374
    %v376 = vsel %vm88, %v370, %v372
    %v377 = vsel %vm88, %v368, %v370
    %v378 = vsel %vm88, %v374, %v368
    %v379 = vld [vmem:[#allocation4] sm:$0xff]
    %v380 = vld [vmem:[#allocation4 + $0x8] sm:$0xff]
    %v381 = vld [vmem:[#allocation4 + $0x10] sm:$0xff]
    %v382 = vld [vmem:[#allocation4 + $0x18] sm:$0xff]
    %v383 = vadd.f32 %v378, %v379
    %v384 = vadd.f32 %v377, %v380
    %v385 = vadd.f32 %v376, %v381
    %v386 = vadd.f32 %v375, %v382
    %387 = vrot.lane.b32.xlu0 %v363, 16
    %v388 = vpop.permute.xlu0 %387
    %389 = vrot.lane.b32.xlu0 %v364, 16
    %v390 = vpop.permute.xlu0 %389
    %391 = vrot.lane.b32.xlu0 %v365, 16
    %v392 = vpop.permute.xlu0 %391
    %393 = vrot.lane.b32.xlu0 %v366, 16
    %v394 = vpop.permute.xlu0 %393
    %v395 = vsel %vm109, %v392, %v394
    %v396 = vsel %vm109, %v390, %v392
    %v397 = vsel %vm109, %v388, %v390
    %v398 = vsel %vm109, %v394, %v388
    %s399 = scalar_lea.vmem [#allocation4], 32
    %v400 = vld [vmem:[%s399] sm:$0xff]
    %v401 = vld [vmem:[%s399 + $0x8] sm:$0xff]
    %v402 = vld [vmem:[%s399 + $0x10] sm:$0xff]
    %v403 = vld [vmem:[%s399 + $0x18] sm:$0xff]
    %v404 = vadd.f32 %v398, %v400
    %v405 = vadd.f32 %v397, %v401
    %v406 = vadd.f32 %v396, %v402
    %v407 = vadd.f32 %v395, %v403
    %v408 = vmax.f32 %v383, %v404
    %v409 = vmax.f32 %v384, %v405
    %v410 = vmax.f32 %v385, %v406
    %v411 = vmax.f32 %v386, %v407
    %412 = vrot.lane.b32.xlu0 %v363, 15
    %v413 = vpop.permute.xlu0 %412
    %414 = vrot.lane.b32.xlu0 %v364, 15
    %v415 = vpop.permute.xlu0 %414
    %416 = vrot.lane.b32.xlu0 %v365, 15
    %v417 = vpop.permute.xlu0 %416
    %418 = vrot.lane.b32.xlu0 %v366, 15
    %v419 = vpop.permute.xlu0 %418
    %v420 = vsel %vm131, %v417, %v419
    %v421 = vsel %vm131, %v415, %v417
    %v422 = vsel %vm131, %v413, %v415
    %v423 = vsel %vm131, %v419, %v413
    %s424 = scalar_lea.vmem [#allocation4], 64
    %v425 = vld [vmem:[%s424] sm:$0xff]
    %v426 = vld [vmem:[%s424 + $0x8] sm:$0xff]
    %v427 = vld [vmem:[%s424 + $0x10] sm:$0xff]
    %v428 = vld [vmem:[%s424 + $0x18] sm:$0xff]
    %v429 = vadd.f32 %v423, %v425
    %v430 = vadd.f32 %v422, %v426
    %v431 = vadd.f32 %v421, %v427
    %v432 = vadd.f32 %v420, %v428
    %v433 = vmax.f32 %v408, %v429
    %v434 = vmax.f32 %v409, %v430
    %v435 = vmax.f32 %v410, %v431
    %v436 = vmax.f32 %v411, %v432
    %437 = vrot.lane.b32.xlu0 %v363, 1
    %v438 = vpop.permute.xlu0 %437
    %439 = vrot.lane.b32.xlu0 %v364, 1
    %v440 = vpop.permute.xlu0 %439
    %441 = vrot.lane.b32.xlu0 %v365, 1
    %v442 = vpop.permute.xlu0 %441
    %443 = vrot.lane.b32.xlu0 %v366, 1
    %v444 = vpop.permute.xlu0 %443
    %v445 = vsel %vm153, %v442, %v444
    %v446 = vsel %vm153, %v440, %v442
    %v447 = vsel %vm153, %v438, %v440
    %v448 = vsel %vm153, %v444, %v438
    %s449 = scalar_lea.vmem [#allocation4], 96
    %v450 = vld [vmem:[%s449] sm:$0xff]
    %v451 = vld [vmem:[%s449 + $0x8] sm:$0xff]
    %v452 = vld [vmem:[%s449 + $0x10] sm:$0xff]
    %v453 = vld [vmem:[%s449 + $0x18] sm:$0xff]
    %v454 = vadd.f32 %v448, %v450
    %v455 = vadd.f32 %v447, %v451
    %v456 = vadd.f32 %v446, %v452
    %v457 = vadd.f32 %v445, %v453
    %v458 = vmax.f32 %v433, %v454
    %v459 = vmax.f32 %v434, %v455
    %v460 = vmax.f32 %v435, %v456
    %v461 = vmax.f32 %v436, %v457
    %s462 = scalar_lea.vmem [#allocation4], 128
    %v463 = vld [vmem:[%s462] sm:$0xff]
    %v464 = vld [vmem:[%s462 + $0x8] sm:$0xff]
    %v465 = vld [vmem:[%s462 + $0x10] sm:$0xff]
    %v466 = vld [vmem:[%s462 + $0x18] sm:$0xff]
    %v467 = vadd.f32 %v363, %v463
    %v468 = vadd.f32 %v364, %v464
    %v469 = vadd.f32 %v365, %v465
    %v470 = vadd.f32 %v366, %v466
    %v471 = vmax.f32 %v458, %v467
    %v472 = vmax.f32 %v459, %v468
    %v473 = vmax.f32 %v460, %v469
    %v474 = vmax.f32 %v461, %v470
    %475 = vrot.lane.b32.xlu0 %v363, 127
    %v476 = vpop.permute.xlu0 %475
    %477 = vrot.lane.b32.xlu0 %v364, 127
    %v478 = vpop.permute.xlu0 %477
    %479 = vrot.lane.b32.xlu0 %v365, 127
    %v480 = vpop.permute.xlu0 %479
    %481 = vrot.lane.b32.xlu0 %v366, 127
    %v482 = vpop.permute.xlu0 %481
    %v483 = vsel %vm184, %v480, %v482
    %v484 = vsel %vm184, %v478, %v480
    %v485 = vsel %vm184, %v476, %v478
    %v486 = vsel %vm184, %v482, %v476
    %s487 = scalar_lea.vmem [#allocation4], 160
    %v488 = vld [vmem:[%s487] sm:$0xff]
    %v489 = vld [vmem:[%s487 + $0x8] sm:$0xff]
    %v490 = vld [vmem:[%s487 + $0x10] sm:$0xff]
    %v491 = vld [vmem:[%s487 + $0x18] sm:$0xff]
    %v492 = vadd.f32 %v485, %v488
    %v493 = vadd.f32 %v484, %v489
    %v494 = vadd.f32 %v483, %v490
    %v495 = vadd.f32 %v486, %v491
    %v496 = vmax.f32 %v471, %v492
    %v497 = vmax.f32 %v472, %v493
    %v498 = vmax.f32 %v473, %v494
    %v499 = vmax.f32 %v474, %v495
    %500 = vrot.lane.b32.xlu0 %v363, 113
    %v501 = vpop.permute.xlu0 %500
    %502 = vrot.lane.b32.xlu0 %v364, 113
    %v503 = vpop.permute.xlu0 %502
    %504 = vrot.lane.b32.xlu0 %v365, 113
    %v505 = vpop.permute.xlu0 %504
    %506 = vrot.lane.b32.xlu0 %v366, 113
    %v507 = vpop.permute.xlu0 %506
    %v508 = vsel %vm206, %v505, %v507
    %v509 = vsel %vm206, %v503, %v505
    %v510 = vsel %vm206, %v501, %v503
    %v511 = vsel %vm206, %v507, %v501
    %s512 = scalar_lea.vmem [#allocation4], 192
    %v513 = vld [vmem:[%s512] sm:$0xff]
    %v514 = vld [vmem:[%s512 + $0x8] sm:$0xff]
    %v515 = vld [vmem:[%s512 + $0x10] sm:$0xff]
    %v516 = vld [vmem:[%s512 + $0x18] sm:$0xff]
    %v517 = vadd.f32 %v510, %v513
    %v518 = vadd.f32 %v509, %v514
    %v519 = vadd.f32 %v508, %v515
    %v520 = vadd.f32 %v511, %v516
    %v521 = vmax.f32 %v496, %v517
    %v522 = vmax.f32 %v497, %v518
    %v523 = vmax.f32 %v498, %v519
    %v524 = vmax.f32 %v499, %v520
    %525 = vrot.lane.b32.xlu0 %v363, 112
    %v526 = vpop.permute.xlu0 %525
    %527 = vrot.lane.b32.xlu0 %v364, 112
    %v528 = vpop.permute.xlu0 %527
    %529 = vrot.lane.b32.xlu0 %v365, 112
    %v530 = vpop.permute.xlu0 %529
    %531 = vrot.lane.b32.xlu0 %v366, 112
    %v532 = vpop.permute.xlu0 %531
    %v533 = vsel %vm228, %v530, %v532
    %v534 = vsel %vm228, %v528, %v530
    %v535 = vsel %vm228, %v526, %v528
    %v536 = vsel %vm228, %v532, %v526
    %s537 = scalar_lea.vmem [#allocation4], 224
    %v538 = vld [vmem:[%s537] sm:$0xff]
    %v539 = vld [vmem:[%s537 + $0x8] sm:$0xff]
    %v540 = vld [vmem:[%s537 + $0x10] sm:$0xff]
    %v541 = vld [vmem:[%s537 + $0x18] sm:$0xff]
    %v542 = vadd.f32 %v535, %v538
    %v543 = vadd.f32 %v534, %v539
    %v544 = vadd.f32 %v533, %v540
    %v545 = vadd.f32 %v536, %v541
    %v546 = vmax.f32 %v521, %v542
    %v547 = vmax.f32 %v522, %v543
    %v548 = vmax.f32 %v523, %v544
    %v549 = vmax.f32 %v524, %v545
    %550 = vrot.lane.b32.xlu0 %v363, 111
    %v551 = vpop.permute.xlu0 %550
    %552 = vrot.lane.b32.xlu0 %v364, 111
    %v553 = vpop.permute.xlu0 %552
    %554 = vrot.lane.b32.xlu0 %v365, 111
    %v555 = vpop.permute.xlu0 %554
    %556 = vrot.lane.b32.xlu0 %v366, 111
    %v557 = vpop.permute.xlu0 %556
    %v558 = vsel %vm250, %v555, %v557
    %v559 = vsel %vm250, %v553, %v555
    %v560 = vsel %vm250, %v551, %v553
    %v561 = vsel %vm250, %v557, %v551
    %s562 = scalar_lea.vmem [#allocation4], 256
    %v563 = vld [vmem:[%s562] sm:$0xff]
    %v564 = vld [vmem:[%s562 + $0x8] sm:$0xff]
    %v565 = vld [vmem:[%s562 + $0x10] sm:$0xff]
    %v566 = vld [vmem:[%s562 + $0x18] sm:$0xff]
    %v567 = vadd.f32 %v560, %v563
    %v568 = vadd.f32 %v559, %v564
    %v569 = vadd.f32 %v558, %v565
    %v570 = vadd.f32 %v561, %v566
    %v571 = vmax.f32 %v546, %v567
    %v572 = vmax.f32 %v547, %v568
    %v573 = vmax.f32 %v548, %v569
    %v574 = vmax.f32 %v549, %v570
    %575 = vrot.lane.b32.xlu0 %v571, 17
    %v576 = vpop.permute.xlu0 %575
    %577 = vrot.lane.b32.xlu0 %v572, 17
    %v578 = vpop.permute.xlu0 %577
    %579 = vrot.lane.b32.xlu0 %v573, 17
    %v580 = vpop.permute.xlu0 %579
    %581 = vrot.lane.b32.xlu0 %v574, 17
    %v582 = vpop.permute.xlu0 %581
    %v583 = vsel %vm88, %v580, %v582
    %v584 = vsel %vm88, %v578, %v580
    %v585 = vsel %vm88, %v576, %v578
    %v586 = vsel %vm88, %v582, %v576
    %v587 = vmul.f32 %v586, %v93
    %v588 = vmul.f32 %v585, %v94
    %v589 = vmul.f32 %v584, %v95
    %v590 = vmul.f32 %v583, %v96
    %591 = vrot.lane.b32.xlu0 %v571, 16
    %v592 = vpop.permute.xlu0 %591
    %593 = vrot.lane.b32.xlu0 %v572, 16
    %v594 = vpop.permute.xlu0 %593
    %595 = vrot.lane.b32.xlu0 %v573, 16
    %v596 = vpop.permute.xlu0 %595
    %597 = vrot.lane.b32.xlu0 %v574, 16
    %v598 = vpop.permute.xlu0 %597
    %v599 = vsel %vm109, %v596, %v598
    %v600 = vsel %vm109, %v594, %v596
    %v601 = vsel %vm109, %v592, %v594
    %v602 = vsel %vm109, %v598, %v592
    %v603 = vmul.f32 %v602, %v115
    %v604 = vmul.f32 %v601, %v116
    %v605 = vmul.f32 %v600, %v117
    %v606 = vmul.f32 %v599, %v118
    %607 = vrot.lane.b32.xlu0 %v571, 15
    %v608 = vpop.permute.xlu0 %607
    %609 = vrot.lane.b32.xlu0 %v572, 15
    %v610 = vpop.permute.xlu0 %609
    %611 = vrot.lane.b32.xlu0 %v573, 15
    %v612 = vpop.permute.xlu0 %611
    %613 = vrot.lane.b32.xlu0 %v574, 15
    %v614 = vpop.permute.xlu0 %613
    %v615 = vsel %vm131, %v612, %v614
    %v616 = vsel %vm131, %v610, %v612
    %v617 = vsel %vm131, %v608, %v610
    %v618 = vsel %vm131, %v614, %v608
    %v619 = vmul.f32 %v618, %v137
    %v620 = vmul.f32 %v617, %v138
    %v621 = vmul.f32 %v616, %v139
    %v622 = vmul.f32 %v615, %v140
    %623 = vrot.lane.b32.xlu0 %v571, 1
    %v624 = vpop.permute.xlu0 %623
    %625 = vrot.lane.b32.xlu0 %v572, 1
    %v626 = vpop.permute.xlu0 %625
    %627 = vrot.lane.b32.xlu0 %v573, 1
    %v628 = vpop.permute.xlu0 %627
    %629 = vrot.lane.b32.xlu0 %v574, 1
    %v630 = vpop.permute.xlu0 %629
    %v631 = vsel %vm153, %v628, %v630
    %v632 = vsel %vm153, %v626, %v628
    %v633 = vsel %vm153, %v624, %v626
    %v634 = vsel %vm153, %v630, %v624
    %v635 = vmul.f32 %v634, %v159
    %v636 = vmul.f32 %v633, %v160
    %v637 = vmul.f32 %v632, %v161
    %v638 = vmul.f32 %v631, %v162
    %v639 = vmul.f32 %v571, %v168
    %v640 = vmul.f32 %v572, %v169
    %v641 = vmul.f32 %v573, %v170
    %v642 = vmul.f32 %v574, %v171
    %643 = vrot.lane.b32.xlu0 %v571, 127
    %v644 = vpop.permute.xlu0 %643
    %645 = vrot.lane.b32.xlu0 %v572, 127
    %v646 = vpop.permute.xlu0 %645
    %647 = vrot.lane.b32.xlu0 %v573, 127
    %v648 = vpop.permute.xlu0 %647
    %649 = vrot.lane.b32.xlu0 %v574, 127
    %v650 = vpop.permute.xlu0 %649
    %v651 = vsel %vm184, %v648, %v650
    %v652 = vsel %vm184, %v646, %v648
    %v653 = vsel %vm184, %v644, %v646
    %v654 = vsel %vm184, %v650, %v644
    %v655 = vmul.f32 %v653, %v190
    %v656 = vmul.f32 %v652, %v191
    %v657 = vmul.f32 %v651, %v192
    %v658 = vmul.f32 %v654, %v193
    %659 = vrot.lane.b32.xlu0 %v571, 113
    %v660 = vpop.permute.xlu0 %659
    %661 = vrot.lane.b32.xlu0 %v572, 113
    %v662 = vpop.permute.xlu0 %661
    %663 = vrot.lane.b32.xlu0 %v573, 113
    %v664 = vpop.permute.xlu0 %663
    %665 = vrot.lane.b32.xlu0 %v574, 113
    %v666 = vpop.permute.xlu0 %665
    %v667 = vsel %vm206, %v664, %v666
    %v668 = vsel %vm206, %v662, %v664
    %v669 = vsel %vm206, %v660, %v662
    %v670 = vsel %vm206, %v666, %v660
    %v671 = vmul.f32 %v669, %v212
    %v672 = vmul.f32 %v668, %v213
    %v673 = vmul.f32 %v667, %v214
    %v674 = vmul.f32 %v670, %v215
    %675 = vrot.lane.b32.xlu0 %v571, 112
    %v676 = vpop.permute.xlu0 %675
    %677 = vrot.lane.b32.xlu0 %v572, 112
    %v678 = vpop.permute.xlu0 %677
    %679 = vrot.lane.b32.xlu0 %v573, 112
    %v680 = vpop.permute.xlu0 %679
    %681 = vrot.lane.b32.xlu0 %v574, 112
    %v682 = vpop.permute.xlu0 %681
    %v683 = vsel %vm228, %v680, %v682
    %v684 = vsel %vm228, %v678, %v680
    %v685 = vsel %vm228, %v676, %v678
    %v686 = vsel %vm228, %v682, %v676
    %v687 = vmul.f32 %v685, %v234
    %v688 = vmul.f32 %v684, %v235
    %v689 = vmul.f32 %v683, %v236
    %v690 = vmul.f32 %v686, %v237
    %691 = vrot.lane.b32.xlu0 %v571, 111
    %v692 = vpop.permute.xlu0 %691
    %693 = vrot.lane.b32.xlu0 %v572, 111
    %v694 = vpop.permute.xlu0 %693
    %695 = vrot.lane.b32.xlu0 %v573, 111
    %v696 = vpop.permute.xlu0 %695
    %697 = vrot.lane.b32.xlu0 %v574, 111
    %v698 = vpop.permute.xlu0 %697
    %v699 = vsel %vm250, %v696, %v698
    %v700 = vsel %vm250, %v694, %v696
    %v701 = vsel %vm250, %v692, %v694
    %v702 = vsel %vm250, %v698, %v692
    %v703 = vmul.f32 %v701, %v256
    %v704 = vmul.f32 %v700, %v257
    %v705 = vmul.f32 %v699, %v258
    %v706 = vmul.f32 %v702, %v259
    %v707 = vld [vmem:[%s5] sm:$0xff]
    %v708 = vld [vmem:[%s6] sm:$0xff]
    %710 = vset.pattern.permute.xlu0 0
    %711 = vperm.xlu0 %710, %v708
    %v712 = vpop.permute.xlu0 %711
    %v715 = vsel %vm271, %v707, 0
    %717 = vmatpush.msra.mxu0 0.0
    %718 = vmatpush.msra.mxu0 0.0
    %719 = vmatpush.msra.mxu0 0.0
    %720 = vmatpush.msra.mxu0 0.0
    %721 = vmatpush.msra.mxu0 0.0
    %722 = vmatpush.msra.mxu0 0.0
    %723 = vmatpush.msra.mxu0 0.0
    %724 = vmatpush.msra.mxu0 %v703
    %725 = vmatpush.msra.mxu0 %v687
    %726 = vmatpush.msra.mxu0 %v671
    %727 = vmatpush.msra.mxu0 %v655
    %728 = vmatpush.msra.mxu0 %v639
    %729 = vmatpush.msra.mxu0 %v635
    %730 = vmatpush.msra.mxu0 %v619
    %731 = vmatpush.msra.mxu0 %v603
    %732 = vmatpush.msra.mxu0 %v587
    %733 = vmatmul.f32.gmra.mxu0 %v715
    %v734 = vpop.f32.mrf.mxu0
    %v735 = vadd.f32 %v712, %v734
    %736 = vdwg.mxu0
    %737 = vmatpush.msra.mxu0 0.0
    %738 = vmatpush.msra.mxu0 0.0
    %739 = vmatpush.msra.mxu0 0.0
    %740 = vmatpush.msra.mxu0 0.0
    %741 = vmatpush.msra.mxu0 0.0
    %742 = vmatpush.msra.mxu0 0.0
    %743 = vmatpush.msra.mxu0 0.0
    %744 = vmatpush.msra.mxu0 %v704
    %745 = vmatpush.msra.mxu0 %v688
    %746 = vmatpush.msra.mxu0 %v672
    %747 = vmatpush.msra.mxu0 %v656
    %748 = vmatpush.msra.mxu0 %v640
    %749 = vmatpush.msra.mxu0 %v636
    %750 = vmatpush.msra.mxu0 %v620
    %751 = vmatpush.msra.mxu0 %v604
    %752 = vmatpush.msra.mxu0 %v588
    %753 = vmatmul.f32.gmra.mxu0 %v715
    %v754 = vpop.f32.mrf.mxu0
    %v755 = vadd.f32 %v712, %v754
    %756 = vdwg.mxu0
    %757 = vmatpush.msra.mxu0 0.0
    %758 = vmatpush.msra.mxu0 0.0
    %759 = vmatpush.msra.mxu0 0.0
    %760 = vmatpush.msra.mxu0 0.0
    %761 = vmatpush.msra.mxu0 0.0
    %762 = vmatpush.msra.mxu0 0.0
    %763 = vmatpush.msra.mxu0 0.0
    %764 = vmatpush.msra.mxu0 %v705
    %765 = vmatpush.msra.mxu0 %v689
    %766 = vmatpush.msra.mxu0 %v673
    %767 = vmatpush.msra.mxu0 %v657
    %768 = vmatpush.msra.mxu0 %v641
    %769 = vmatpush.msra.mxu0 %v637
    %770 = vmatpush.msra.mxu0 %v621
    %771 = vmatpush.msra.mxu0 %v605
    %772 = vmatpush.msra.mxu0 %v589
    %773 = vmatmul.f32.gmra.mxu0 %v715
    %v774 = vpop.f32.mrf.mxu0
    %v775 = vadd.f32 %v712, %v774
    %776 = vdwg.mxu0
    %777 = vmatpush.msra.mxu0 0.0
    %778 = vmatpush.msra.mxu0 0.0
    %779 = vmatpush.msra.mxu0 0.0
    %780 = vmatpush.msra.mxu0 0.0
    %781 = vmatpush.msra.mxu0 0.0
    %782 = vmatpush.msra.mxu0 0.0
    %783 = vmatpush.msra.mxu0 0.0
    %784 = vmatpush.msra.mxu0 %v706
    %785 = vmatpush.msra.mxu0 %v690
    %786 = vmatpush.msra.mxu0 %v674
    %787 = vmatpush.msra.mxu0 %v658
    %788 = vmatpush.msra.mxu0 %v642
    %789 = vmatpush.msra.mxu0 %v638
    %790 = vmatpush.msra.mxu0 %v622
    %791 = vmatpush.msra.mxu0 %v606
    %792 = vmatpush.msra.mxu0 %v590
    %793 = vmatmul.f32.gmra.mxu0 %v715
    %v794 = vpop.f32.mrf.mxu0
    %v795 = vadd.f32 %v712, %v794
    %796 = vdwg.mxu0
    %vm797 = vcmp.gt.f32.partialorder %v735, 0.0
    %vm798 = vcmp.gt.f32.partialorder %v755, 0.0
    %vm799 = vcmp.gt.f32.partialorder %v775, 0.0
    %vm800 = vcmp.gt.f32.partialorder %v795, 0.0
    %v801 = vmul.f32 %v735, 0.01
    %v802 = vmul.f32 %v755, 0.01
    %v803 = vmul.f32 %v775, 0.01
    %v804 = vmul.f32 %v795, 0.01
    %v805 = vsel %vm797, %v735, %v801
    %v806 = vsel %vm798, %v755, %v802
    %v807 = vsel %vm799, %v775, %v803
    %v808 = vsel %vm800, %v795, %v804
    %809 = vst [vmem:[%s7] sm:$0xff] %v805
    %810 = vst [vmem:[%s7 + $0x8] sm:$0xff] %v806
    %s811 = scalar_lea.vmem %s7, 16
    %812 = vst [vmem:[%s811] sm:$0xff] %v807
    %813 = vst [vmem:[%s811 + $0x8] sm:$0xff] %v808
    // Predicated region
    $region38: #{conv_dim_reduction_block_forward.1} parent=1 // pred_check
      _
    $region39: #{conv_dim_reduction_block_forward.1} parent=1 // pred_check_branch
      %815 = sbr.rel (0) target = $region41
    $region40: #{conv_dim_reduction_block_forward.1} parent=1 // pred_region
      _
    $region41: #{conv_dim_reduction_block_forward.1} parent=1 // pred_fallthru
      _
    // Predicated region
    $region42: #{conv_dim_reduction_block_forward.1} parent=1 // pred_check
      _
    $region43: #{conv_dim_reduction_block_forward.1} parent=1 // pred_check_branch
      %817 = sbr.rel (0) target = $region45
    $region44: #{conv_dim_reduction_block_forward.1} parent=1 // pred_region
      _
    $region45: #{conv_dim_reduction_block_forward.1} parent=1 // pred_fallthru
      _
    %818 = vsyncpa [#allocation3], 1
    %819 = vsyncpa [#allocation5], 1

</llo_original>
